<compile_context>
chip_gen: v6e
topology: v6e:2x2x1
jax: 0.10.0
libtpu: 0.0.40
codegen_flags: <defaults>
</compile_context>

<pallas_src>
import functools

import jax
import jax.numpy as jnp
from jax.experimental import pallas as pl
from jax.experimental.pallas import tpu as pltpu

_MIB = 1024 * 1024
_MAX_TILE_B = 8192


def _round_up(v, m):
    return (v + m - 1) // m * m


def _cdiv(a, b):
    return -(-a // b)


# ---------------------------------------------------------------------------
# Kernel
# ---------------------------------------------------------------------------
def _projector_kernel(n_layers, *refs):
    """Fused MLP kernel.  refs = (x_ref, w0, b0, w1, b1, ..., o_ref)."""
    x_ref = refs[0]
    o_ref = refs[-1]
    param_refs = refs[1:-1]

    h = x_ref[...]
    for layer in range(n_layers):
        w_ref = param_refs[2 * layer]
        b_ref = param_refs[2 * layer + 1]
        # Cast the activation tile to the weights' dtype *inside* the kernel
        # (bf16 fast path on v6e/v7x); accumulate in f32 on the MXU.
        h = jnp.dot(h.astype(w_ref.dtype), w_ref[...],
                    preferred_element_type=jnp.float32)
        h = h + b_ref[...].astype(jnp.float32)      # biases are kept in f32
        if layer != n_layers - 1:                    # ReLU on all but last layer
            h = jnp.maximum(h, 0.0)
    o_ref[...] = h.astype(o_ref.dtype)


# ---------------------------------------------------------------------------
# Parameter preparation (pad / cast ONCE, reuse across forward calls)
# ---------------------------------------------------------------------------
def prepare_projector_params(weights, biases, *, param_dtype=None,
                             lane_multiple=128):
    """Pad internal hidden dims to the lane width and optionally cast weights.

    * in_features of layer 0 and out_features of the last layer keep their
      true sizes, so x is read and the output is written without padding.
    * biases stay float32 regardless of param_dtype (the add is f32 anyway).
    Call this once and reuse the result across forward calls.
    """
    assert len(weights) == len(biases) and len(weights) >= 1
    n = len(weights)
    dims = [weights[0].shape[0]] + [w.shape[1] for w in weights]
    pdims = list(dims)
    for li in range(1, n):                           # internal dims only
        pdims[li] = _round_up(dims[li], lane_multiple)

    pw, pb = [], []
    for li, (w, b) in enumerate(zip(weights, biases)):
        w = jnp.pad(w, ((0, pdims[li] - w.shape[0]),
                        (0, pdims[li + 1] - w.shape[1])))
        if param_dtype is not None:
            w = w.astype(param_dtype)
        b = jnp.pad(b.astype(jnp.float32),
                    ((0, pdims[li + 1] - b.shape[0]),)).reshape(1, -1)
        pw.append(w)
        pb.append(b)
    return pw, pb


# ---------------------------------------------------------------------------
# VMEM budgeting / batch-tile selection
# ---------------------------------------------------------------------------
def _vmem_capacity_bytes():
    try:
        return int(pltpu.get_tpu_info().vmem_capacity_bytes)
    except Exception:
        return 64 * _MIB               # conservative (v7x-sized) default


def _vmem_budget_and_limit_cap():
    cap = _vmem_capacity_bytes()
    if cap <= 64 * _MIB:               # v7x: 64 MiB per TC -> leave headroom
        return 40 * _MIB, 48 * _MIB
    return 80 * _MIB, 96 * _MIB        # v5e / v6e: 128 MiB physical


def _estimate_vmem_bytes(tile_b, in_dim, out_dim, max_feat,
                         x_itemsize, out_itemsize, w_itemsize,
                         param_bytes, param_buffers):
    est = 2 * tile_b * in_dim * x_itemsize        # input tile (double-buffered)
    est += 2 * tile_b * out_dim * out_itemsize    # output tile (double-buffered)
    est += 2 * tile_b * max_feat * 4              # two live f32 intermediates
    est += tile_b * in_dim * w_itemsize           # in-kernel cast of the x tile
    est += param_buffers * param_bytes            # resident weights + biases
    return est


def _pick_tile_b(B, max_tile):
    """Largest legal batch tile within budget; prefers an even number of grid
    steps (v7x two-TensorCore balance) and big tiles to amortize step cost."""
    max_tile = max(8, min(max_tile, _MAX_TILE_B))
    if B <= max_tile:
        if B >= 512:                              # worth splitting across 2 TCs
            half = _round_up(_cdiv(B, 2), 8)
            if half <= max_tile:
                return half                       # 2 even grid steps
        return B                                  # single step (block == full dim)
    tile = max(256, max_tile // 256 * 256)        # MXU-row aligned
    steps = _cdiv(B, tile)
    if steps % 2 == 1:                            # keep both v7x TCs busy
        steps += 1
        tile = _round_up(_cdiv(B, steps), 256)
    return tile


# ---------------------------------------------------------------------------
# Forward pass
# ---------------------------------------------------------------------------
def projector_forward_prepared(x, pw, pb, *, tile_b=None):
    """Run the Projector MLP as a single fused Pallas kernel.

    x:  (B, in_dim);  pw/pb:  output of prepare_projector_params.
    """
    B, in_dim = x.shape
    n_layers = len(pw)
    assert in_dim == pw[0].shape[0], (in_dim, pw[0].shape)
    out_dim = pw[-1].shape[1]
    out_dtype = x.dtype

    x_itemsize = jnp.dtype(x.dtype).itemsize
    w_itemsize = jnp.dtype(pw[0].dtype).itemsize
    out_itemsize = jnp.dtype(out_dtype).itemsize
    param_bytes = (sum(int(w.size) * w.dtype.itemsize for w in pw)
                   + sum(int(b.size) * b.dtype.itemsize for b in pb))
    max_feat = max(w.shape[1] for w in pw)

    budget, limit_cap = _vmem_budget_and_limit_cap()
    per_row = (2 * in_dim * x_itemsize + 2 * out_dim * out_itemsize
               + 2 * max_feat * 4 + in_dim * w_itemsize)
    # Conservative: assume double-buffered params (the no-Buffered(1) fallback).
    avail = max(budget - 2 * param_bytes, per_row * 8)
    max_tile = avail // per_row

    if tile_b is None:
        tile_b = _pick_tile_b(B, max_tile)
    # Legality (second-to-last block dim: multiple of 8 OR equal full dim).
    if tile_b >= B:
        tile_b = B
    else:
        tile_b = max(8, (tile_b // 8) * 8)
    # Safety shrink (should not trigger given the budget-derived max_tile).
    while tile_b > 8 and _estimate_vmem_bytes(
            tile_b, in_dim, out_dim, max_feat, x_itemsize, out_itemsize,
            w_itemsize, param_bytes, 2) > budget:
        tile_b = max(8, (tile_b // 2 // 8) * 8)

    steps = _cdiv(B, tile_b)
    Bp = steps * tile_b
    if Bp != B:
        x = jnp.pad(x, ((0, Bp - B), (0, 0)))     # zero rows, sliced off below

    est = _estimate_vmem_bytes(tile_b, in_dim, out_dim, max_feat, x_itemsize,
                               out_itemsize, w_itemsize, param_bytes, 2)
    vmem_limit = int(min(max(est * 3 // 2, 16 * _MIB), limit_cap))

    args = [x]
    for w, b in zip(pw, pb):
        args.append(w)
        args.append(b)

    def build(single_buffer_params):
        # x / out tiles march over the batch; weights & biases use a constant
        # index_map so they stay VMEM-resident across all grid steps.
        in_specs = [pl.BlockSpec((tile_b, in_dim), lambda i: (i, 0))]
        for w, b in zip(pw, pb):
            if single_buffer_params:
                wspec = pl.BlockSpec(w.shape, lambda i: (0, 0),
                                     pipeline_mode=pl.Buffered(1))
                bspec = pl.BlockSpec(b.shape, lambda i: (0, 0),
                                     pipeline_mode=pl.Buffered(1))
            else:
                wspec = pl.BlockSpec(w.shape, lambda i: (0, 0))
                bspec = pl.BlockSpec(b.shape, lambda i: (0, 0))
            in_specs.append(wspec)
            in_specs.append(bspec)
        out_specs = pl.BlockSpec((tile_b, out_dim), lambda i: (i, 0))
        return pl.pallas_call(
            functools.partial(_projector_kernel, n_layers),
            out_shape=jax.ShapeDtypeStruct((Bp, out_dim), out_dtype),
            grid_spec=pltpu.PrefetchScalarGridSpec(
                num_scalar_prefetch=0,
                grid=(steps,),
                in_specs=in_specs,
                out_specs=out_specs,
            ),
            compiler_params=pltpu.CompilerParams(
                dimension_semantics=("parallel",),
                vmem_limit_bytes=vmem_limit,
            ),
        )

    try:
        out = build(True)(*args)
    except Exception:
        # Fallback for JAX builds without BlockSpec.pipeline_mode / Buffered(1).
        out = build(False)(*args)

    return out if Bp == B else out[:B]


def projector_forward(x, weights, biases, *, tile_b=None, param_dtype=None):
    """Convenience wrapper: pad/cast params and run the fused kernel.

    For repeated inference calls, call prepare_projector_params once and use
    projector_forward_prepared directly (avoids re-padding weights per call).
    """
    pw, pb = prepare_projector_params(weights, biases, param_dtype=param_dtype)
    return projector_forward_prepared(x, pw, pb, tile_b=tile_b)


# ---------------------------------------------------------------------------
# Params / reference
# ---------------------------------------------------------------------------
def init_projector_params(key, hidden_dim, Lvpj, depth=2):
    """Deterministic parameter init mirroring the Projector layer shapes."""
    dims = [hidden_dim] + [Lvpj[0]] * (depth - 1) + [Lvpj[1]]
    weights, biases = [], []
    for li in range(len(dims) - 1):
        kw, kb, key = jax.random.split(key, 3)
        fan_in, fan_out = dims[li], dims[li + 1]
        bound = 1.0 / (fan_in ** 0.5)   # same scale as PyTorch Linear default
        # stored pre-transposed: (in_features, out_features)
        w = jax.random.uniform(kw, (fan_in, fan_out), jnp.float32, -bound, bound)
        b = jax.random.uniform(kb, (fan_out,), jnp.float32, -bound, bound)
        weights.append(w)
        biases.append(b)
    return weights, biases


def projector_reference(x, weights, biases):
    """Plain-JAX reference of the Projector forward pass."""
    h = x
    for li, (w, b) in enumerate(zip(weights, biases)):
        h = h @ w + b
        if li != len(weights) - 1:
            h = jnp.maximum(h, 0.0)
    return h


if __name__ == "__main__":
    key = jax.random.PRNGKey(0)

    # Projector(Lvpj=[64, 16], hidden_dim=32, bnorm=False, depth=2) on (B, 32).
    B, hidden_dim = 16, 32
    Lvpj = [64, 16]
    depth = 2

    kx, kp, kx2 = jax.random.split(key, 3)
    x = jax.random.normal(kx, (B, hidden_dim), jnp.float32)
    weights, biases = init_projector_params(kp, hidden_dim, Lvpj, depth=depth)
    ref = projector_reference(x, weights, biases)

    # Prepare (pad internal dims) the params ONCE; reuse across calls.
    pw, pb = prepare_projector_params(weights, biases)

    # f32 path: tiny batch -> single grid step, unpadded x read & output write.
    out = jax.block_until_ready(projector_forward_prepared(x, pw, pb))
    assert out.shape == (B, Lvpj[1]), out.shape
    assert jnp.allclose(out, ref, atol=1e-5, rtol=1e-5), "f32 mismatch"

    # bf16 fast path: weights cast once at prepare time, x tile cast in-kernel,
    # biases and accumulation stay f32.
    pw16, pb16 = prepare_projector_params(weights, biases,
                                          param_dtype=jnp.bfloat16)
    out_bf16 = jax.block_until_ready(projector_forward_prepared(x, pw16, pb16))
    assert out_bf16.shape == (B, Lvpj[1])
    assert jnp.allclose(out_bf16, ref, atol=5e-2, rtol=5e-2), "bf16 mismatch"

    # Ragged, multi-step batch with a forced small tile: exercises batch
    # padding, grid > 1 and the unpadded-output store path.
    B2 = 272
    x2 = jax.random.normal(kx2, (B2, hidden_dim), jnp.float32)
    ref2 = projector_reference(x2, weights, biases)
    out2 = jax.block_until_ready(
        projector_forward_prepared(x2, pw, pb, tile_b=128))
    assert out2.shape == (B2, Lvpj[1]), out2.shape
    assert jnp.allclose(out2, ref2, atol=1e-4, rtol=1e-4), "tiled mismatch"

    # depth=3 (extra hidden Linear+ReLU) via the convenience wrapper.
    w3, b3 = init_projector_params(kp, hidden_dim, Lvpj, depth=3)
    ref3 = projector_reference(x, w3, b3)
    out3 = jax.block_until_ready(projector_forward(x, w3, b3))
    assert out3.shape == (B, Lvpj[1]), out3.shape
    assert jnp.allclose(out3, ref3, atol=1e-4, rtol=1e-4), "depth-3 mismatch"

    print("KERNEL_OK")
</pallas_src>

<mosaic_0001>
module attributes {stable_mosaic.version = 11 : i64} {
  func.func @_projector_kernel(%arg0: i32, %arg1: memref<16x32xf32, #tpu.memory_space<vmem>>, %arg2: memref<32x128xf32, #tpu.memory_space<vmem>>, %arg3: memref<1x128xf32, #tpu.memory_space<vmem>>, %arg4: memref<128x16xf32, #tpu.memory_space<vmem>>, %arg5: memref<1x16xf32, #tpu.memory_space<vmem>>, %arg6: memref<16x16xf32, #tpu.memory_space<vmem>>) attributes {dimension_semantics = [#tpu.dimension_semantics<parallel>], iteration_bounds = array<i64: 1>, scalar_prefetch = 0 : i64, scratch_operands = 0 : i64, tpu.core_type = #tpu.core_type<tc>, window_params = [{transform_indices = @transform_0, window_bounds = array<i64: 16, 32>}, {pipeline_mode = #tpu.pipeline_mode<synchronous>, transform_indices = @transform_1, window_bounds = array<i64: 32, 128>}, {pipeline_mode = #tpu.pipeline_mode<synchronous>, transform_indices = @transform_2, window_bounds = array<i64: 1, 128>}, {pipeline_mode = #tpu.pipeline_mode<synchronous>, transform_indices = @transform_3, window_bounds = array<i64: 128, 16>}, {pipeline_mode = #tpu.pipeline_mode<synchronous>, transform_indices = @transform_4, window_bounds = array<i64: 1, 16>}, {transform_indices = @transform_5, window_bounds = array<i64: 16, 16>}]} {
    %c0 = arith.constant 0 : index
    %c0_0 = arith.constant 0 : index
    %0 = vector.load %arg1[%c0, %c0_0] : memref<16x32xf32, #tpu.memory_space<vmem>>, vector<16x32xf32>
    %c0_1 = arith.constant 0 : index
    %c0_2 = arith.constant 0 : index
    %1 = vector.load %arg2[%c0_1, %c0_2] : memref<32x128xf32, #tpu.memory_space<vmem>>, vector<32x128xf32>
    %cst = arith.constant dense<0.000000e+00> : vector<16x128xf32>
    %2 = tpu.matmul %0, %1, %cst {dimension_numbers = #tpu.dot_dimension_numbers<[1], [0], [0], [1], [0, 0, 1, 1], [], []>} : vector<16x32xf32>, vector<32x128xf32>, vector<16x128xf32> -> vector<16x128xf32>
    %c0_3 = arith.constant 0 : index
    %c0_4 = arith.constant 0 : index
    %3 = vector.load %arg3[%c0_3, %c0_4] : memref<1x128xf32, #tpu.memory_space<vmem>>, vector<1x128xf32>
    %4 = vector.broadcast %3 : vector<1x128xf32> to vector<16x128xf32>
    %5 = arith.addf %2, %4 : vector<16x128xf32>
    %cst_5 = arith.constant 0.000000e+00 : f32
    %6 = vector.broadcast %cst_5 : f32 to vector<16x128xf32>
    %7 = arith.maximumf %5, %6 : vector<16x128xf32>
    %c0_6 = arith.constant 0 : index
    %c0_7 = arith.constant 0 : index
    %8 = vector.load %arg4[%c0_6, %c0_7] : memref<128x16xf32, #tpu.memory_space<vmem>>, vector<128x16xf32>
    %cst_8 = arith.constant dense<0.000000e+00> : vector<16x16xf32>
    %9 = tpu.matmul %7, %8, %cst_8 {dimension_numbers = #tpu.dot_dimension_numbers<[1], [0], [0], [1], [0, 0, 1, 1], [], []>} : vector<16x128xf32>, vector<128x16xf32>, vector<16x16xf32> -> vector<16x16xf32>
    %c0_9 = arith.constant 0 : index
    %c0_10 = arith.constant 0 : index
    %10 = vector.load %arg5[%c0_9, %c0_10] : memref<1x16xf32, #tpu.memory_space<vmem>>, vector<1x16xf32>
    %11 = vector.broadcast %10 : vector<1x16xf32> to vector<16x16xf32>
    %12 = arith.addf %9, %11 : vector<16x16xf32>
    %c0_11 = arith.constant 0 : index
    %c0_12 = arith.constant 0 : index
    %13 = vector.load %arg6[%c0_11, %c0_12] : memref<16x16xf32, #tpu.memory_space<vmem>>, vector<16x16xf32>
    tpu.vector_store %arg6[%c0_11, %c0_12], %12 {strides = array<i32>} : memref<16x16xf32, #tpu.memory_space<vmem>>, vector<16x16xf32>,
    return
  }
  func.func @transform_0(%arg0: i32) -> (i32, i32) {
    %c0_i32 = arith.constant 0 : i32
    %c0_i32_0 = arith.constant 0 : i32
    return %arg0, %c0_i32 : i32, i32
  }
  func.func @transform_1(%arg0: i32) -> (i32, i32) {
    %c0_i32 = arith.constant 0 : i32
    %c0_i32_0 = arith.constant 0 : i32
    %c0_i32_1 = arith.constant 0 : i32
    return %c0_i32, %c0_i32_0 : i32, i32
  }
  func.func @transform_2(%arg0: i32) -> (i32, i32) {
    %c0_i32 = arith.constant 0 : i32
    %c0_i32_0 = arith.constant 0 : i32
    %c0_i32_1 = arith.constant 0 : i32
    return %c0_i32, %c0_i32_0 : i32, i32
  }
  func.func @transform_3(%arg0: i32) -> (i32, i32) {
    %c0_i32 = arith.constant 0 : i32
    %c0_i32_0 = arith.constant 0 : i32
    %c0_i32_1 = arith.constant 0 : i32
    return %c0_i32, %c0_i32_0 : i32, i32
  }
  func.func @transform_4(%arg0: i32) -> (i32, i32) {
    %c0_i32 = arith.constant 0 : i32
    %c0_i32_0 = arith.constant 0 : i32
    %c0_i32_1 = arith.constant 0 : i32
    return %c0_i32, %c0_i32_0 : i32, i32
  }
  func.func @transform_5(%arg0: i32) -> (i32, i32) {
    %c0_i32 = arith.constant 0 : i32
    %c0_i32_0 = arith.constant 0 : i32
    return %arg0, %c0_i32 : i32, i32
  }
}

module attributes {stable_mosaic.version = 11 : i64} {
  func.func @_projector_kernel(%arg0: i32, %arg1: memref<16x32xf32, #tpu.memory_space<vmem>>, %arg2: memref<32x128xf32, #tpu.memory_space<vmem>>, %arg3: memref<1x128xf32, #tpu.memory_space<vmem>>, %arg4: memref<128x16xf32, #tpu.memory_space<vmem>>, %arg5: memref<1x16xf32, #tpu.memory_space<vmem>>, %arg6: memref<16x16xf32, #tpu.memory_space<vmem>>) attributes {dimension_semantics = [#tpu.dimension_semantics<parallel>], iteration_bounds = array<i64: 1>, scalar_prefetch = 0 : i64, scratch_operands = 0 : i64, tpu.core_type = #tpu.core_type<tc>, window_params = [{transform_indices = @transform_0, window_bounds = array<i64: 16, 32>}, {pipeline_mode = #tpu.pipeline_mode<synchronous>, transform_indices = @transform_1, window_bounds = array<i64: 32, 128>}, {pipeline_mode = #tpu.pipeline_mode<synchronous>, transform_indices = @transform_2, window_bounds = array<i64: 1, 128>}, {pipeline_mode = #tpu.pipeline_mode<synchronous>, transform_indices = @transform_3, window_bounds = array<i64: 128, 16>}, {pipeline_mode = #tpu.pipeline_mode<synchronous>, transform_indices = @transform_4, window_bounds = array<i64: 1, 16>}, {transform_indices = @transform_5, window_bounds = array<i64: 16, 16>}]} {
    %c0 = arith.constant 0 : index
    %c0_0 = arith.constant 0 : index
    %0 = vector.load %arg1[%c0, %c0_0] : memref<16x32xf32, #tpu.memory_space<vmem>>, vector<16x32xf32>
    %c0_1 = arith.constant 0 : index
    %c0_2 = arith.constant 0 : index
    %1 = vector.load %arg2[%c0_1, %c0_2] : memref<32x128xf32, #tpu.memory_space<vmem>>, vector<32x128xf32>
    %cst = arith.constant dense<0.000000e+00> : vector<16x128xf32>
    %2 = tpu.matmul %0, %1, %cst {dimension_numbers = #tpu.dot_dimension_numbers<[1], [0], [0], [1], [0, 0, 1, 1], [], []>} : vector<16x32xf32>, vector<32x128xf32>, vector<16x128xf32> -> vector<16x128xf32>
    %c0_3 = arith.constant 0 : index
    %c0_4 = arith.constant 0 : index
    %3 = vector.load %arg3[%c0_3, %c0_4] : memref<1x128xf32, #tpu.memory_space<vmem>>, vector<1x128xf32>
    %4 = vector.broadcast %3 : vector<1x128xf32> to vector<16x128xf32>
    %5 = arith.addf %2, %4 : vector<16x128xf32>
    %cst_5 = arith.constant 0.000000e+00 : f32
    %6 = vector.broadcast %cst_5 : f32 to vector<16x128xf32>
    %7 = arith.maximumf %5, %6 : vector<16x128xf32>
    %c0_6 = arith.constant 0 : index
    %c0_7 = arith.constant 0 : index
    %8 = vector.load %arg4[%c0_6, %c0_7] : memref<128x16xf32, #tpu.memory_space<vmem>>, vector<128x16xf32>
    %cst_8 = arith.constant dense<0.000000e+00> : vector<16x16xf32>
    %9 = tpu.matmul %7, %8, %cst_8 {dimension_numbers = #tpu.dot_dimension_numbers<[1], [0], [0], [1], [0, 0, 1, 1], [], []>} : vector<16x128xf32>, vector<128x16xf32>, vector<16x16xf32> -> vector<16x16xf32>
    %c0_9 = arith.constant 0 : index
    %c0_10 = arith.constant 0 : index
    %10 = vector.load %arg5[%c0_9, %c0_10] : memref<1x16xf32, #tpu.memory_space<vmem>>, vector<1x16xf32>
    %11 = vector.broadcast %10 : vector<1x16xf32> to vector<16x16xf32>
    %12 = arith.addf %9, %11 : vector<16x16xf32>
    %c0_11 = arith.constant 0 : index
    %c0_12 = arith.constant 0 : index
    %13 = vector.load %arg6[%c0_11, %c0_12] : memref<16x16xf32, #tpu.memory_space<vmem>>, vector<16x16xf32>
    tpu.vector_store %arg6[%c0_11, %c0_12], %12 {strides = array<i32>} : memref<16x16xf32, #tpu.memory_space<vmem>>, vector<16x16xf32>,
    return
  }
  func.func @transform_0(%arg0: i32) -> (i32, i32) {
    %c0_i32 = arith.constant 0 : i32
    %c0_i32_0 = arith.constant 0 : i32
    return %arg0, %c0_i32 : i32, i32
  }
  func.func @transform_1(%arg0: i32) -> (i32, i32) {
    %c0_i32 = arith.constant 0 : i32
    %c0_i32_0 = arith.constant 0 : i32
    %c0_i32_1 = arith.constant 0 : i32
    return %c0_i32, %c0_i32_0 : i32, i32
  }
  func.func @transform_2(%arg0: i32) -> (i32, i32) {
    %c0_i32 = arith.constant 0 : i32
    %c0_i32_0 = arith.constant 0 : i32
    %c0_i32_1 = arith.constant 0 : i32
    return %c0_i32, %c0_i32_0 : i32, i32
  }
  func.func @transform_3(%arg0: i32) -> (i32, i32) {
    %c0_i32 = arith.constant 0 : i32
    %c0_i32_0 = arith.constant 0 : i32
    %c0_i32_1 = arith.constant 0 : i32
    return %c0_i32, %c0_i32_0 : i32, i32
  }
  func.func @transform_4(%arg0: i32) -> (i32, i32) {
    %c0_i32 = arith.constant 0 : i32
    %c0_i32_0 = arith.constant 0 : i32
    %c0_i32_1 = arith.constant 0 : i32
    return %c0_i32, %c0_i32_0 : i32, i32
  }
  func.func @transform_5(%arg0: i32) -> (i32, i32) {
    %c0_i32 = arith.constant 0 : i32
    %c0_i32_0 = arith.constant 0 : i32
    return %arg0, %c0_i32 : i32, i32
  }
}

</mosaic_0001>

<llo_original>
// kernel: tpu_custom_call.1
$region0: #{tpu_custom_call.1}
  #allocation0 [shape = 'u32[]', space=smem, size = 0x4, offset = 0x4, fixed_abs, tag = 'smem constant byte address 0x4 - core index']
  #allocation1 [shape = 'u32[144,128]{1,0:T(1,128)}', space=vmem, size = 0x12000, scoped, tag = 'internal scratch']
  %s0 = inlined_call_operand.vmem [shape: f32[16,32], index: 0, kind: input, shape index: {}]
  %s1 = inlined_call_operand.vmem [shape: f32[32,128], index: 1, kind: input, shape index: {}]
  %s2 = inlined_call_operand.vmem [shape: f32[1,128], index: 2, kind: input, shape index: {}]
  %s3 = inlined_call_operand.vmem [shape: f32[128,16], index: 3, kind: input, shape index: {}]
  %s4 = inlined_call_operand.vmem [shape: f32[1,16], index: 4, kind: input, shape index: {}]
  %s5 = inlined_call_operand.hbm [shape: f32[16,16], index: 5, kind: output, shape index: {}]
  %s6 = sld [smem:[#allocation0]]
  $region30: #{tpu_custom_call.1} parent=0
    _
  %s8 = ssub.s32 1, %s6
  %s9 = scalar_select 0, %s8, %s6
  $region1: #{tpu_custom_call.1} parent=0
    #allocation2 [shape = 'u8[8192]{0}', space=vmem, size = 0x2000, scoped, tag = 'output window, operand 0, single buffered']
    #allocation3 [shape = 's32[1]{0}', space=sflag, size = 0x4, scoped, tag = 'scoped memory for tpu_custom_call.1']
    %10 = vsyncpa [#allocation3], 0
    // Predicated region
    $region2: #{tpu_custom_call.1} parent=1 // pred_check
      _
    $region3: #{tpu_custom_call.1} parent=1 // pred_check_branch
      %12 = sbr.rel (0) target = $region5
    $region4: #{tpu_custom_call.1} parent=1 // pred_region
      _
    $region5: #{tpu_custom_call.1} parent=1 // pred_fallthru
      _
    // Predicated region
    $region6: #{tpu_custom_call.1} parent=1 // pred_check
      _
    $region7: #{tpu_custom_call.1} parent=1 // pred_check_branch
      %14 = sbr.rel (0) target = $region9
    $region8: #{tpu_custom_call.1} parent=1 // pred_region
      _
    $region9: #{tpu_custom_call.1} parent=1 // pred_fallthru
      _
    // Predicated region
    $region10: #{tpu_custom_call.1} parent=1 // pred_check
      _
    $region11: #{tpu_custom_call.1} parent=1 // pred_check_branch
      %16 = sbr.rel (0) target = $region13
    $region12: #{tpu_custom_call.1} parent=1 // pred_region
      _
    $region13: #{tpu_custom_call.1} parent=1 // pred_fallthru
      _
    // Predicated region
    $region14: #{tpu_custom_call.1} parent=1 // pred_check
      _
    $region15: #{tpu_custom_call.1} parent=1 // pred_check_branch
      %18 = sbr.rel (0) target = $region17
    $region16: #{tpu_custom_call.1} parent=1 // pred_region
      _
    $region17: #{tpu_custom_call.1} parent=1 // pred_fallthru
      _
    // Predicated region
    $region18: #{tpu_custom_call.1} parent=1 // pred_check
      _
    $region19: #{tpu_custom_call.1} parent=1 // pred_check_branch
      %20 = sbr.rel (0) target = $region21
    $region20: #{tpu_custom_call.1} parent=1 // pred_region
      _
    $region21: #{tpu_custom_call.1} parent=1 // pred_fallthru
      _
    %v21 = vld [vmem:[%s0] sm:$0xff]
    %v22 = vld [vmem:[%s0 + $0x8] sm:$0xff]
    %v23 = vld [vmem:[%s1] sm:$0xff]
    %v24 = vld [vmem:[%s1 + $0x8] sm:$0xff]
    %v25 = vld [vmem:[%s1 + $0x10] sm:$0xff]
    %v26 = vld [vmem:[%s1 + $0x18] sm:$0xff]
    %v27 = vld [vmem:[%s2] sm:$0x1]
    %v29 = vlaneseq
    %v30 = vshrl.u32 %v29, 7
    %v31 = vsub.s32 0, %v30
    %v32 = vrot.slane %v27, %v31
    %vm34 = vcmask 261120
    %v36 = vsel %vm34, %v21, 0
    %v39 = vsel %vm34, %v22, 0
    %41 = vmatprep.subr.mxu0 0.0
    %42 = vmatpush1.msra.mxu0 0.0
    %43 = vmatprep.subr.mxu0 0.0
    %44 = vmatpush1.msra.mxu0 0.0
    %45 = vmatprep.subr.mxu0 0.0
    %46 = vmatpush1.msra.mxu0 0.0
    %47 = vmatprep.subr.mxu0 0.0
    %48 = vmatpush1.msra.mxu0 0.0
    %49 = vmatprep.subr.mxu0 0.0
    %50 = vmatpush1.msra.mxu0 0.0
    %51 = vmatprep.subr.mxu0 0.0
    %52 = vmatpush1.msra.mxu0 0.0
    %53 = vmatprep.subr.mxu0 0.0
    %54 = vmatpush1.msra.mxu0 0.0
    %55 = vmatprep.subr.mxu0 0.0
    %56 = vmatpush1.msra.mxu0 0.0
    %57 = vmatprep.subr.mxu0 0.0
    %58 = vmatpush1.msra.mxu0 0.0
    %59 = vmatprep.subr.mxu0 0.0
    %60 = vmatpush1.msra.mxu0 0.0
    %61 = vmatprep.subr.mxu0 0.0
    %62 = vmatpush1.msra.mxu0 0.0
    %63 = vmatprep.subr.mxu0 0.0
    %64 = vmatpush1.msra.mxu0 0.0
    %65 = vmatprep.subr.mxu0 0.0
    %66 = vmatpush1.msra.mxu0 %v26
    %67 = vmatprep.subr.mxu0 0.0
    %68 = vmatpush1.msra.mxu0 %v25
    %69 = vmatprep.subr.mxu0 0.0
    %70 = vmatpush1.msra.mxu0 %v24
    %71 = vmatprep.subr.mxu0 0.0
    %72 = vmatpush1.msra.mxu0 %v23
    %73 = vmatprep.subr.mxu0 0.0
    %74 = vmatpush2.msra.mxu0 0.0
    %75 = vmatprep.subr.mxu0 0.0
    %76 = vmatpush2.msra.mxu0 0.0
    %77 = vmatprep.subr.mxu0 0.0
    %78 = vmatpush2.msra.mxu0 0.0
    %79 = vmatprep.subr.mxu0 0.0
    %80 = vmatpush2.msra.mxu0 0.0
    %81 = vmatprep.subr.mxu0 0.0
    %82 = vmatpush2.msra.mxu0 0.0
    %83 = vmatprep.subr.mxu0 0.0
    %84 = vmatpush2.msra.mxu0 0.0
    %85 = vmatprep.subr.mxu0 0.0
    %86 = vmatpush2.msra.mxu0 0.0
    %87 = vmatprep.subr.mxu0 0.0
    %88 = vmatpush2.msra.mxu0 0.0
    %89 = vmatprep.subr.mxu0 0.0
    %90 = vmatpush2.msra.mxu0 0.0
    %91 = vmatprep.subr.mxu0 0.0
    %92 = vmatpush2.msra.mxu0 0.0
    %93 = vmatprep.subr.mxu0 0.0
    %94 = vmatpush2.msra.mxu0 0.0
    %95 = vmatprep.subr.mxu0 0.0
    %96 = vmatpush2.msra.mxu0 0.0
    %97 = vmatprep.subr.mxu0 0.0
    %98 = vmatpush2.msra.mxu0 0.0
    %99 = vmatprep.subr.mxu0 0.0
    %100 = vmatpush2.msra.mxu0 0.0
    %101 = vmatprep.subr.mxu0 0.0
    %102 = vmatpush2.msra.mxu0 0.0
    %103 = vmatprep.subr.mxu0 0.0
    %104 = vmatpush2.msra.mxu0 0.0
    %105 = vmatprep.mubr.f32.mxu0 0.0
    %106 = vmatmul.mubr.f32.gmra.mxu0 %v36
    %v107 = vpop.f32.mrf.mxu0
    %v108 = vadd.f32 %v32, %v107
    %v109 = vpop.f32.mrf.mxu0
    %110 = vmatprep.mubr.f32.mxu0 0.0
    %111 = vmatmul.mubr.f32.gmra.mxu0 %v39
    %v112 = vpop.f32.mrf.mxu0
    %v113 = vadd.f32 %v32, %v112
    %v114 = vpop.f32.mrf.mxu0
    %115 = vdwg.mxu0
    %v116 = vmax.f32 %v108, 0.0
    %v117 = vmax.f32 %v113, 0.0
    %v118 = vld [vmem:[%s3] sm:$0xff]
    %v119 = vld [vmem:[%s3 + $0x8] sm:$0xff]
    %v120 = vld [vmem:[%s3 + $0x10] sm:$0xff]
    %v121 = vld [vmem:[%s3 + $0x18] sm:$0xff]
    %v122 = vld [vmem:[%s3 + $0x20] sm:$0xff]
    %v123 = vld [vmem:[%s3 + $0x28] sm:$0xff]
    %v124 = vld [vmem:[%s3 + $0x30] sm:$0xff]
    %v125 = vld [vmem:[%s3 + $0x38] sm:$0xff]
    %v126 = vld [vmem:[%s3 + $0x40] sm:$0xff]
    %v127 = vld [vmem:[%s3 + $0x48] sm:$0xff]
    %v128 = vld [vmem:[%s3 + $0x50] sm:$0xff]
    %v129 = vld [vmem:[%s3 + $0x58] sm:$0xff]
    %v130 = vld [vmem:[%s3 + $0x60] sm:$0xff]
    %v131 = vld [vmem:[%s3 + $0x68] sm:$0xff]
    %v132 = vld [vmem:[%s3 + $0x70] sm:$0xff]
    %v133 = vld [vmem:[%s3 + $0x78] sm:$0xff]
    %v134 = vld [vmem:[%s4] sm:$0x1]
    %v136 = vlaneseq
    %v137 = vshrl.u32 %v136, 7
    %v138 = vsub.s32 0, %v137
    %v139 = vrot.slane %v134, %v138
    %141 = vmatprep.subr.mxu0 0.0
    %142 = vmatpush1.msra.mxu0 %v133
    %143 = vmatprep.subr.mxu0 0.0
    %144 = vmatpush1.msra.mxu0 %v132
    %145 = vmatprep.subr.mxu0 0.0
    %146 = vmatpush1.msra.mxu0 %v131
    %147 = vmatprep.subr.mxu0 0.0
    %148 = vmatpush1.msra.mxu0 %v130
    %149 = vmatprep.subr.mxu0 0.0
    %150 = vmatpush1.msra.mxu0 %v129
    %151 = vmatprep.subr.mxu0 0.0
    %152 = vmatpush1.msra.mxu0 %v128
    %153 = vmatprep.subr.mxu0 0.0
    %154 = vmatpush1.msra.mxu0 %v127
    %155 = vmatprep.subr.mxu0 0.0
    %156 = vmatpush1.msra.mxu0 %v126
    %157 = vmatprep.subr.mxu0 0.0
    %158 = vmatpush1.msra.mxu0 %v125
    %159 = vmatprep.subr.mxu0 0.0
    %160 = vmatpush1.msra.mxu0 %v124
    %161 = vmatprep.subr.mxu0 0.0
    %162 = vmatpush1.msra.mxu0 %v123
    %163 = vmatprep.subr.mxu0 0.0
    %164 = vmatpush1.msra.mxu0 %v122
    %165 = vmatprep.subr.mxu0 0.0
    %166 = vmatpush1.msra.mxu0 %v121
    %167 = vmatprep.subr.mxu0 0.0
    %168 = vmatpush1.msra.mxu0 %v120
    %169 = vmatprep.subr.mxu0 0.0
    %170 = vmatpush1.msra.mxu0 %v119
    %171 = vmatprep.subr.mxu0 0.0
    %172 = vmatpush1.msra.mxu0 %v118
    %173 = vmatprep.subr.mxu0 0.0
    %174 = vmatpush2.msra.mxu0 0.0
    %175 = vmatprep.subr.mxu0 0.0
    %176 = vmatpush2.msra.mxu0 0.0
    %177 = vmatprep.subr.mxu0 0.0
    %178 = vmatpush2.msra.mxu0 0.0
    %179 = vmatprep.subr.mxu0 0.0
    %180 = vmatpush2.msra.mxu0 0.0
    %181 = vmatprep.subr.mxu0 0.0
    %182 = vmatpush2.msra.mxu0 0.0
    %183 = vmatprep.subr.mxu0 0.0
    %184 = vmatpush2.msra.mxu0 0.0
    %185 = vmatprep.subr.mxu0 0.0
    %186 = vmatpush2.msra.mxu0 0.0
    %187 = vmatprep.subr.mxu0 0.0
    %188 = vmatpush2.msra.mxu0 0.0
    %189 = vmatprep.subr.mxu0 0.0
    %190 = vmatpush2.msra.mxu0 0.0
    %191 = vmatprep.subr.mxu0 0.0
    %192 = vmatpush2.msra.mxu0 0.0
    %193 = vmatprep.subr.mxu0 0.0
    %194 = vmatpush2.msra.mxu0 0.0
    %195 = vmatprep.subr.mxu0 0.0
    %196 = vmatpush2.msra.mxu0 0.0
    %197 = vmatprep.subr.mxu0 0.0
    %198 = vmatpush2.msra.mxu0 0.0
    %199 = vmatprep.subr.mxu0 0.0
    %200 = vmatpush2.msra.mxu0 0.0
    %201 = vmatprep.subr.mxu0 0.0
    %202 = vmatpush2.msra.mxu0 0.0
    %203 = vmatprep.subr.mxu0 0.0
    %204 = vmatpush2.msra.mxu0 0.0
    %205 = vmatprep.mubr.f32.mxu0 0.0
    %206 = vmatmul.mubr.f32.gmra.mxu0 %v116
    %v207 = vpop.f32.mrf.mxu0
    %v208 = vadd.f32 %v139, %v207
    %v209 = vpop.f32.mrf.mxu0
    %210 = vmatprep.mubr.f32.mxu0 0.0
    %211 = vmatmul.mubr.f32.gmra.mxu0 %v117
    %v212 = vpop.f32.mrf.mxu0
    %v213 = vadd.f32 %v139, %v212
    %v214 = vpop.f32.mrf.mxu0
    %215 = vdwg.mxu0
    %vm216 = vcmask 130048
    %217 = vst.msk [vmem:[#allocation2] sm:$0xff] %vm216, %v208
    %218 = vst.msk [vmem:[#allocation2 + $0x8] sm:$0xff] %vm216, %v213
    // Predicated region
    $region22: #{tpu_custom_call.1} parent=1 // pred_check
      _
    $region23: #{tpu_custom_call.1} parent=1 // pred_check_branch
      %220 = sbr.rel (0) target = $region25
    $region24: #{tpu_custom_call.1} parent=1 // pred_region
      %s222 = ssub.s32 256, 256
      %223 = vsyncadd [#allocation3], %s222
      %s224 = sshll.u32 [#allocation2], 4
      %s225 = int_to_ptr.vmem [resolvable:$true] %s224
      %230 = dma.vmem_to_hbm [thread:$0]  %s225, 256, %s5, [#allocation3], 128, 128, 8
    $region25: #{tpu_custom_call.1} parent=1 // pred_fallthru
      _
    // Predicated region
    $region26: #{tpu_custom_call.1} parent=1 // pred_check
      _
    $region27: #{tpu_custom_call.1} parent=1 // pred_check_branch
      %232 = sbr.rel (0) target = $region29
    $region28: #{tpu_custom_call.1} parent=1 // pred_region
      %233 = dma.done [#allocation3], 256
    $region29: #{tpu_custom_call.1} parent=1 // pred_fallthru
      _
    %234 = vsyncpa [#allocation3], 1

// kernel: tpu_custom_call.1
$region0: #{tpu_custom_call.1}
  #allocation0 [shape = 'u32[]', space=smem, size = 0x4, offset = 0x4, fixed_abs, tag = 'smem constant byte address 0x4 - core index']
  #allocation1 [shape = 'u32[144,128]{1,0:T(1,128)}', space=vmem, size = 0x12000, scoped, tag = 'internal scratch']
  %s0 = inlined_call_operand.vmem [shape: f32[16,32], index: 0, kind: input, shape index: {}]
  %s1 = inlined_call_operand.vmem [shape: f32[32,128], index: 1, kind: input, shape index: {}]
  %s2 = inlined_call_operand.vmem [shape: f32[1,128], index: 2, kind: input, shape index: {}]
  %s3 = inlined_call_operand.vmem [shape: f32[128,16], index: 3, kind: input, shape index: {}]
  %s4 = inlined_call_operand.vmem [shape: f32[1,16], index: 4, kind: input, shape index: {}]
  %s5 = inlined_call_operand.hbm [shape: f32[16,16], index: 5, kind: output, shape index: {}]
  %s6 = sld [smem:[#allocation0]]
  $region30: #{tpu_custom_call.1} parent=0
    _
  %s8 = ssub.s32 1, %s6
  %s9 = scalar_select 0, %s8, %s6
  $region1: #{tpu_custom_call.1} parent=0
    #allocation2 [shape = 'u8[8192]{0}', space=vmem, size = 0x2000, scoped, tag = 'output window, operand 0, single buffered']
    #allocation3 [shape = 's32[1]{0}', space=sflag, size = 0x4, scoped, tag = 'scoped memory for tpu_custom_call.1']
    %10 = vsyncpa [#allocation3], 0
    // Predicated region
    $region2: #{tpu_custom_call.1} parent=1 // pred_check
      _
    $region3: #{tpu_custom_call.1} parent=1 // pred_check_branch
      %12 = sbr.rel (0) target = $region5
    $region4: #{tpu_custom_call.1} parent=1 // pred_region
      _
    $region5: #{tpu_custom_call.1} parent=1 // pred_fallthru
      _
    // Predicated region
    $region6: #{tpu_custom_call.1} parent=1 // pred_check
      _
    $region7: #{tpu_custom_call.1} parent=1 // pred_check_branch
      %14 = sbr.rel (0) target = $region9
    $region8: #{tpu_custom_call.1} parent=1 // pred_region
      _
    $region9: #{tpu_custom_call.1} parent=1 // pred_fallthru
      _
    // Predicated region
    $region10: #{tpu_custom_call.1} parent=1 // pred_check
      _
    $region11: #{tpu_custom_call.1} parent=1 // pred_check_branch
      %16 = sbr.rel (0) target = $region13
    $region12: #{tpu_custom_call.1} parent=1 // pred_region
      _
    $region13: #{tpu_custom_call.1} parent=1 // pred_fallthru
      _
    // Predicated region
    $region14: #{tpu_custom_call.1} parent=1 // pred_check
      _
    $region15: #{tpu_custom_call.1} parent=1 // pred_check_branch
      %18 = sbr.rel (0) target = $region17
    $region16: #{tpu_custom_call.1} parent=1 // pred_region
      _
    $region17: #{tpu_custom_call.1} parent=1 // pred_fallthru
      _
    // Predicated region
    $region18: #{tpu_custom_call.1} parent=1 // pred_check
      _
    $region19: #{tpu_custom_call.1} parent=1 // pred_check_branch
      %20 = sbr.rel (0) target = $region21
    $region20: #{tpu_custom_call.1} parent=1 // pred_region
      _
    $region21: #{tpu_custom_call.1} parent=1 // pred_fallthru
      _
    %v21 = vld [vmem:[%s0] sm:$0xff]
    %v22 = vld [vmem:[%s0 + $0x8] sm:$0xff]
    %v23 = vld [vmem:[%s1] sm:$0xff]
    %v24 = vld [vmem:[%s1 + $0x8] sm:$0xff]
    %v25 = vld [vmem:[%s1 + $0x10] sm:$0xff]
    %v26 = vld [vmem:[%s1 + $0x18] sm:$0xff]
    %v27 = vld [vmem:[%s2] sm:$0x1]
    %v29 = vlaneseq
    %v30 = vshrl.u32 %v29, 7
    %v31 = vsub.s32 0, %v30
    %v32 = vrot.slane %v27, %v31
    %vm34 = vcmask 261120
    %v36 = vsel %vm34, %v21, 0
    %v39 = vsel %vm34, %v22, 0
    %41 = vmatprep.subr.mxu0 0.0
    %42 = vmatpush1.msra.mxu0 0.0
    %43 = vmatprep.subr.mxu0 0.0
    %44 = vmatpush1.msra.mxu0 0.0
    %45 = vmatprep.subr.mxu0 0.0
    %46 = vmatpush1.msra.mxu0 0.0
    %47 = vmatprep.subr.mxu0 0.0
    %48 = vmatpush1.msra.mxu0 0.0
    %49 = vmatprep.subr.mxu0 0.0
    %50 = vmatpush1.msra.mxu0 0.0
    %51 = vmatprep.subr.mxu0 0.0
    %52 = vmatpush1.msra.mxu0 0.0
    %53 = vmatprep.subr.mxu0 0.0
    %54 = vmatpush1.msra.mxu0 0.0
    %55 = vmatprep.subr.mxu0 0.0
    %56 = vmatpush1.msra.mxu0 0.0
    %57 = vmatprep.subr.mxu0 0.0
    %58 = vmatpush1.msra.mxu0 0.0
    %59 = vmatprep.subr.mxu0 0.0
    %60 = vmatpush1.msra.mxu0 0.0
    %61 = vmatprep.subr.mxu0 0.0
    %62 = vmatpush1.msra.mxu0 0.0
    %63 = vmatprep.subr.mxu0 0.0
    %64 = vmatpush1.msra.mxu0 0.0
    %65 = vmatprep.subr.mxu0 0.0
    %66 = vmatpush1.msra.mxu0 %v26
    %67 = vmatprep.subr.mxu0 0.0
    %68 = vmatpush1.msra.mxu0 %v25
    %69 = vmatprep.subr.mxu0 0.0
    %70 = vmatpush1.msra.mxu0 %v24
    %71 = vmatprep.subr.mxu0 0.0
    %72 = vmatpush1.msra.mxu0 %v23
    %73 = vmatprep.subr.mxu0 0.0
    %74 = vmatpush2.msra.mxu0 0.0
    %75 = vmatprep.subr.mxu0 0.0
    %76 = vmatpush2.msra.mxu0 0.0
    %77 = vmatprep.subr.mxu0 0.0
    %78 = vmatpush2.msra.mxu0 0.0
    %79 = vmatprep.subr.mxu0 0.0
    %80 = vmatpush2.msra.mxu0 0.0
    %81 = vmatprep.subr.mxu0 0.0
    %82 = vmatpush2.msra.mxu0 0.0
    %83 = vmatprep.subr.mxu0 0.0
    %84 = vmatpush2.msra.mxu0 0.0
    %85 = vmatprep.subr.mxu0 0.0
    %86 = vmatpush2.msra.mxu0 0.0
    %87 = vmatprep.subr.mxu0 0.0
    %88 = vmatpush2.msra.mxu0 0.0
    %89 = vmatprep.subr.mxu0 0.0
    %90 = vmatpush2.msra.mxu0 0.0
    %91 = vmatprep.subr.mxu0 0.0
    %92 = vmatpush2.msra.mxu0 0.0
    %93 = vmatprep.subr.mxu0 0.0
    %94 = vmatpush2.msra.mxu0 0.0
    %95 = vmatprep.subr.mxu0 0.0
    %96 = vmatpush2.msra.mxu0 0.0
    %97 = vmatprep.subr.mxu0 0.0
    %98 = vmatpush2.msra.mxu0 0.0
    %99 = vmatprep.subr.mxu0 0.0
    %100 = vmatpush2.msra.mxu0 0.0
    %101 = vmatprep.subr.mxu0 0.0
    %102 = vmatpush2.msra.mxu0 0.0
    %103 = vmatprep.subr.mxu0 0.0
    %104 = vmatpush2.msra.mxu0 0.0
    %105 = vmatprep.mubr.f32.mxu0 0.0
    %106 = vmatmul.mubr.f32.gmra.mxu0 %v36
    %v107 = vpop.f32.mrf.mxu0
    %v108 = vadd.f32 %v32, %v107
    %v109 = vpop.f32.mrf.mxu0
    %110 = vmatprep.mubr.f32.mxu0 0.0
    %111 = vmatmul.mubr.f32.gmra.mxu0 %v39
    %v112 = vpop.f32.mrf.mxu0
    %v113 = vadd.f32 %v32, %v112
    %v114 = vpop.f32.mrf.mxu0
    %115 = vdwg.mxu0
    %v116 = vmax.f32 %v108, 0.0
    %v117 = vmax.f32 %v113, 0.0
    %v118 = vld [vmem:[%s3] sm:$0xff]
    %v119 = vld [vmem:[%s3 + $0x8] sm:$0xff]
    %v120 = vld [vmem:[%s3 + $0x10] sm:$0xff]
    %v121 = vld [vmem:[%s3 + $0x18] sm:$0xff]
    %v122 = vld [vmem:[%s3 + $0x20] sm:$0xff]
    %v123 = vld [vmem:[%s3 + $0x28] sm:$0xff]
    %v124 = vld [vmem:[%s3 + $0x30] sm:$0xff]
    %v125 = vld [vmem:[%s3 + $0x38] sm:$0xff]
    %v126 = vld [vmem:[%s3 + $0x40] sm:$0xff]
    %v127 = vld [vmem:[%s3 + $0x48] sm:$0xff]
    %v128 = vld [vmem:[%s3 + $0x50] sm:$0xff]
    %v129 = vld [vmem:[%s3 + $0x58] sm:$0xff]
    %v130 = vld [vmem:[%s3 + $0x60] sm:$0xff]
    %v131 = vld [vmem:[%s3 + $0x68] sm:$0xff]
    %v132 = vld [vmem:[%s3 + $0x70] sm:$0xff]
    %v133 = vld [vmem:[%s3 + $0x78] sm:$0xff]
    %v134 = vld [vmem:[%s4] sm:$0x1]
    %v136 = vlaneseq
    %v137 = vshrl.u32 %v136, 7
    %v138 = vsub.s32 0, %v137
    %v139 = vrot.slane %v134, %v138
    %141 = vmatprep.subr.mxu0 0.0
    %142 = vmatpush1.msra.mxu0 %v133
    %143 = vmatprep.subr.mxu0 0.0
    %144 = vmatpush1.msra.mxu0 %v132
    %145 = vmatprep.subr.mxu0 0.0
    %146 = vmatpush1.msra.mxu0 %v131
    %147 = vmatprep.subr.mxu0 0.0
    %148 = vmatpush1.msra.mxu0 %v130
    %149 = vmatprep.subr.mxu0 0.0
    %150 = vmatpush1.msra.mxu0 %v129
    %151 = vmatprep.subr.mxu0 0.0
    %152 = vmatpush1.msra.mxu0 %v128
    %153 = vmatprep.subr.mxu0 0.0
    %154 = vmatpush1.msra.mxu0 %v127
    %155 = vmatprep.subr.mxu0 0.0
    %156 = vmatpush1.msra.mxu0 %v126
    %157 = vmatprep.subr.mxu0 0.0
    %158 = vmatpush1.msra.mxu0 %v125
    %159 = vmatprep.subr.mxu0 0.0
    %160 = vmatpush1.msra.mxu0 %v124
    %161 = vmatprep.subr.mxu0 0.0
    %162 = vmatpush1.msra.mxu0 %v123
    %163 = vmatprep.subr.mxu0 0.0
    %164 = vmatpush1.msra.mxu0 %v122
    %165 = vmatprep.subr.mxu0 0.0
    %166 = vmatpush1.msra.mxu0 %v121
    %167 = vmatprep.subr.mxu0 0.0
    %168 = vmatpush1.msra.mxu0 %v120
    %169 = vmatprep.subr.mxu0 0.0
    %170 = vmatpush1.msra.mxu0 %v119
    %171 = vmatprep.subr.mxu0 0.0
    %172 = vmatpush1.msra.mxu0 %v118
    %173 = vmatprep.subr.mxu0 0.0
    %174 = vmatpush2.msra.mxu0 0.0
    %175 = vmatprep.subr.mxu0 0.0
    %176 = vmatpush2.msra.mxu0 0.0
    %177 = vmatprep.subr.mxu0 0.0
    %178 = vmatpush2.msra.mxu0 0.0
    %179 = vmatprep.subr.mxu0 0.0
    %180 = vmatpush2.msra.mxu0 0.0
    %181 = vmatprep.subr.mxu0 0.0
    %182 = vmatpush2.msra.mxu0 0.0
    %183 = vmatprep.subr.mxu0 0.0
    %184 = vmatpush2.msra.mxu0 0.0
    %185 = vmatprep.subr.mxu0 0.0
    %186 = vmatpush2.msra.mxu0 0.0
    %187 = vmatprep.subr.mxu0 0.0
    %188 = vmatpush2.msra.mxu0 0.0
    %189 = vmatprep.subr.mxu0 0.0
    %190 = vmatpush2.msra.mxu0 0.0
    %191 = vmatprep.subr.mxu0 0.0
    %192 = vmatpush2.msra.mxu0 0.0
    %193 = vmatprep.subr.mxu0 0.0
    %194 = vmatpush2.msra.mxu0 0.0
    %195 = vmatprep.subr.mxu0 0.0
    %196 = vmatpush2.msra.mxu0 0.0
    %197 = vmatprep.subr.mxu0 0.0
    %198 = vmatpush2.msra.mxu0 0.0
    %199 = vmatprep.subr.mxu0 0.0
    %200 = vmatpush2.msra.mxu0 0.0
    %201 = vmatprep.subr.mxu0 0.0
    %202 = vmatpush2.msra.mxu0 0.0
    %203 = vmatprep.subr.mxu0 0.0
    %204 = vmatpush2.msra.mxu0 0.0
    %205 = vmatprep.mubr.f32.mxu0 0.0
    %206 = vmatmul.mubr.f32.gmra.mxu0 %v116
    %v207 = vpop.f32.mrf.mxu0
    %v208 = vadd.f32 %v139, %v207
    %v209 = vpop.f32.mrf.mxu0
    %210 = vmatprep.mubr.f32.mxu0 0.0
    %211 = vmatmul.mubr.f32.gmra.mxu0 %v117
    %v212 = vpop.f32.mrf.mxu0
    %v213 = vadd.f32 %v139, %v212
    %v214 = vpop.f32.mrf.mxu0
    %215 = vdwg.mxu0
    %vm216 = vcmask 130048
    %217 = vst.msk [vmem:[#allocation2] sm:$0xff] %vm216, %v208
    %218 = vst.msk [vmem:[#allocation2 + $0x8] sm:$0xff] %vm216, %v213
    // Predicated region
    $region22: #{tpu_custom_call.1} parent=1 // pred_check
      _
    $region23: #{tpu_custom_call.1} parent=1 // pred_check_branch
      %220 = sbr.rel (0) target = $region25
    $region24: #{tpu_custom_call.1} parent=1 // pred_region
      %s222 = ssub.s32 256, 256
      %223 = vsyncadd [#allocation3], %s222
      %s224 = sshll.u32 [#allocation2], 4
      %s225 = int_to_ptr.vmem [resolvable:$true] %s224
      %230 = dma.vmem_to_hbm [thread:$0]  %s225, 256, %s5, [#allocation3], 128, 128, 8
    $region25: #{tpu_custom_call.1} parent=1 // pred_fallthru
      _
    // Predicated region
    $region26: #{tpu_custom_call.1} parent=1 // pred_check
      _
    $region27: #{tpu_custom_call.1} parent=1 // pred_check_branch
      %232 = sbr.rel (0) target = $region29
    $region28: #{tpu_custom_call.1} parent=1 // pred_region
      %233 = dma.done [#allocation3], 256
    $region29: #{tpu_custom_call.1} parent=1 // pred_fallthru
      _
    %234 = vsyncpa [#allocation3], 1

</llo_original>
